<compile_context>
chip_gen: v5e
topology: v5e:2x2
jax: 0.10.0
libtpu: 0.0.40
codegen_flags: <defaults>
</compile_context>

<pallas_src>
import functools

import jax
import jax.numpy as jnp
from jax.experimental import pallas as pl
from jax.experimental.pallas import tpu as pltpu

EPS = 1e-6


def sublayer_connection_kernel(dropout_p,
                               x_ref,       # [TR, D]  activations
                               gamma_ref,   # [1, D]   LayerNorm a_2
                               beta_ref,    # [1, D]   LayerNorm b_2
                               w_ref,       # [D, D]   sublayer weight (bf16)
                               wb_ref,      # [1, D]   sublayer bias
                               *rest):
    if dropout_p > 0.0:
        bits_ref, o_ref = rest               # bits: [TR, D] uint32
    else:
        (o_ref,) = rest

    x = x_ref[...].astype(jnp.float32)
    d = x.shape[-1]

    # --- LayerNorm(x): annotated-transformer variant (unbiased std, std+eps) ---
    mean = jnp.mean(x, axis=-1, keepdims=True)
    diff = x - mean
    var = jnp.sum(diff * diff, axis=-1, keepdims=True) * (1.0 / (d - 1))
    inv_std = 1.0 / (jnp.sqrt(var) + EPS)            # [TR, 1] column -> cheap
    x_norm = (gamma_ref[...].astype(jnp.float32) * (diff * inv_std)
              + beta_ref[...].astype(jnp.float32))

    # --- sublayer(LayerNorm(x)): position-wise linear on the MXU ---
    # bf16 x bf16 operands, f32 accumulation (native MXU rate on v5e/v6e/v7x).
    y = jnp.dot(x_norm.astype(w_ref.dtype), w_ref[...],
                preferred_element_type=jnp.float32)
    y = y + wb_ref[...].astype(jnp.float32)

    # --- dropout (inverted): single integer threshold compare + select ---
    if dropout_p > 0.0:
        threshold = min(int(round(dropout_p * 4294967296.0)), 4294967295)
        keep = bits_ref[...] >= jnp.uint32(threshold)
        y = jnp.where(keep, y * (1.0 / (1.0 - dropout_p)), 0.0)

    # --- residual add (f32 elementwise; cast only at the store) ---
    o_ref[...] = (x + y).astype(o_ref.dtype)


def sublayer_connection(x, gamma, beta, w, b, *, dropout_p=0.0, rng_key=None,
                        row_tile=512, matmul_dtype=jnp.bfloat16):
    """x: [B, S, D].  Returns x + dropout(linear(layernorm(x)))."""
    B, S, D = x.shape
    R = B * S
    x2d = x.reshape(R, D)
    gamma2d = gamma.reshape(1, D)
    beta2d = beta.reshape(1, D)
    b2d = b.reshape(1, D)
    w_mx = w.astype(matmul_dtype)

    # Row tile: multiple of 8 sublanes (512 default is MXU-friendly on
    # v6e/v7x and fits v7x's 64 MiB VMEM with double-buffered in+out).
    # A partial final tile is handled by Pallas padding/masking.
    tr = min(int(row_tile), R)
    if tr < R:
        tr = max(8, (tr // 8) * 8)
    grid = (pl.cdiv(R, tr),)

    row_spec = pl.BlockSpec((tr, D), lambda i: (i, 0))
    vec_spec = pl.BlockSpec((1, D), lambda i: (0, 0))   # VMEM-resident across tiles
    w_spec = pl.BlockSpec((D, D), lambda i: (0, 0))     # VMEM-resident across tiles

    in_specs = [row_spec, vec_spec, vec_spec, w_spec, vec_spec]
    inputs = [x2d, gamma2d, beta2d, w_mx, b2d]

    has_dropout = float(dropout_p) > 0.0
    if has_dropout:
        if rng_key is None:
            rng_key = jax.random.PRNGKey(0)
        bits = jax.random.bits(rng_key, (R, D), dtype=jnp.uint32)
        in_specs.append(row_spec)
        inputs.append(bits)

    itemsize = jnp.dtype(x.dtype).itemsize
    w_itemsize = jnp.dtype(matmul_dtype).itemsize

    # VMEM budget: double-buffered x + out (+ bits), resident weight/params.
    est = 2 * 2 * tr * D * 4 + D * D * w_itemsize + 8 * D * 4
    if has_dropout:
        est += 2 * tr * D * 4
    vmem_limit = int(min(max(2 * est, 32 * 1024 * 1024), 100 * 1024 * 1024))

    cost = pl.CostEstimate(
        flops=2 * R * D * D + 12 * R * D,
        transcendentals=R,                       # one sqrt/recip per row
        bytes_accessed=(2 * R * D * itemsize
                        + (R * D * 4 if has_dropout else 0)
                        + D * D * w_itemsize + 3 * D * 4),
    )

    kernel = functools.partial(sublayer_connection_kernel, float(dropout_p))

    out2d = pl.pallas_call(
        kernel,
        out_shape=jax.ShapeDtypeStruct((R, D), x.dtype),
        grid=grid,
        in_specs=in_specs,
        out_specs=row_spec,
        compiler_params=pltpu.CompilerParams(
            dimension_semantics=("parallel",),   # row tiles independent; megacore on v7x
            vmem_limit_bytes=vmem_limit),
        cost_estimate=cost,
    )(*inputs)

    return out2d.reshape(B, S, D)


def _reference_no_dropout(x, gamma, beta, w, b, matmul_dtype=jnp.bfloat16):
    """Pure-JAX reference of x + linear(layernorm(x)) (dropout in eval mode).

    Uses the same bf16 matmul operands / f32 accumulation as the kernel so the
    comparison isolates kernel correctness rather than bf16 rounding.
    """
    mean = jnp.mean(x, axis=-1, keepdims=True)
    diff = x - mean
    var = jnp.sum(diff * diff, axis=-1, keepdims=True) / (x.shape[-1] - 1)
    std = jnp.sqrt(var)
    x_norm = gamma * diff / (std + EPS) + beta
    y = jnp.einsum("bsd,de->bse",
                   x_norm.astype(matmul_dtype), w.astype(matmul_dtype),
                   preferred_element_type=jnp.float32) + b
    return x + y


if __name__ == "__main__":
    B, S, D = 2, 8, 128          # small shapes; D multiple of 128 (lane axis)
    dropout_p = 0.1

    key = jax.random.PRNGKey(0)
    kx, kw, kd = jax.random.split(key, 3)
    x = jax.random.normal(kx, (B, S, D), dtype=jnp.float32)

    # LayerNorm params: PyTorch-style init (a_2 = ones, b_2 = zeros).
    gamma = jnp.ones((D,), dtype=jnp.float32)
    beta = jnp.zeros((D,), dtype=jnp.float32)

    # Deterministic sublayer (linear D->D) parameters.
    w = jax.random.normal(kw, (D, D), dtype=jnp.float32) * (1.0 / jnp.sqrt(D))
    b = jnp.zeros((D,), dtype=jnp.float32)

    # 1) Eval mode (dropout is identity) vs pure-JAX reference.
    #    row_tile=8 exercises the multi-tile pipelined path (R=16 -> 2 tiles).
    out_eval = sublayer_connection(x, gamma, beta, w, b,
                                   dropout_p=0.0, row_tile=8)
    jax.block_until_ready(out_eval)
    ref = _reference_no_dropout(x, gamma, beta, w, b)
    assert jnp.allclose(out_eval, ref, atol=2e-3, rtol=2e-3), "mismatch vs reference"

    # 2) Training-mode run with in-kernel thresholded dropout.
    out_train = sublayer_connection(x, gamma, beta, w, b,
                                    dropout_p=dropout_p, rng_key=kd, row_tile=8)
    jax.block_until_ready(out_train)
    assert out_train.shape == (B, S, D)
    assert bool(jnp.all(jnp.isfinite(out_train)))

    print("KERNEL_OK")
</pallas_src>

<mosaic_0001>
module attributes {stable_mosaic.version = 11 : i64} {
  func.func @sublayer_connection_kernel(%arg0: i32, %arg1: memref<8x128xf32, #tpu.memory_space<vmem>>, %arg2: memref<1x128xf32, #tpu.memory_space<vmem>>, %arg3: memref<1x128xf32, #tpu.memory_space<vmem>>, %arg4: memref<128x128xbf16, #tpu.memory_space<vmem>>, %arg5: memref<1x128xf32, #tpu.memory_space<vmem>>, %arg6: memref<8x128xf32, #tpu.memory_space<vmem>>) attributes {dimension_semantics = [#tpu.dimension_semantics<parallel>], iteration_bounds = array<i64: 2>, scalar_prefetch = 0 : i64, scratch_operands = 0 : i64, tpu.core_type = #tpu.core_type<tc>, window_params = [{transform_indices = @transform_0, window_bounds = array<i64: 8, 128>}, {pipeline_mode = #tpu.pipeline_mode<synchronous>, transform_indices = @transform_1, window_bounds = array<i64: 1, 128>}, {pipeline_mode = #tpu.pipeline_mode<synchronous>, transform_indices = @transform_2, window_bounds = array<i64: 1, 128>}, {pipeline_mode = #tpu.pipeline_mode<synchronous>, transform_indices = @transform_3, window_bounds = array<i64: 128, 128>}, {pipeline_mode = #tpu.pipeline_mode<synchronous>, transform_indices = @transform_4, window_bounds = array<i64: 1, 128>}, {transform_indices = @transform_5, window_bounds = array<i64: 8, 128>}]} {
    %c0 = arith.constant 0 : index
    %c0_0 = arith.constant 0 : index
    %0 = vector.load %arg1[%c0, %c0_0] : memref<8x128xf32, #tpu.memory_space<vmem>>, vector<8x128xf32>
    %cst = arith.constant dense<0.000000e+00> : vector<8xf32>
    %1 = vector.multi_reduction <add>, %0, %cst [1] : vector<8x128xf32> to vector<8xf32>
    %2 = vector.shape_cast %1 : vector<8xf32> to vector<8x1xf32>
    %cst_1 = arith.constant 1.280000e+02 : f32
    %3 = vector.broadcast %cst_1 : f32 to vector<8x1xf32>
    %4 = arith.divf %2, %3 : vector<8x1xf32>
    %5 = vector.broadcast %4 : vector<8x1xf32> to vector<8x128xf32>
    %6 = arith.subf %0, %5 : vector<8x128xf32>
    %7 = arith.mulf %6, %6 : vector<8x128xf32>
    %cst_2 = arith.constant dense<0.000000e+00> : vector<8xf32>
    %8 = vector.multi_reduction <add>, %7, %cst_2 [1] : vector<8x128xf32> to vector<8xf32>
    %9 = vector.shape_cast %8 : vector<8xf32> to vector<8x1xf32>
    %cst_3 = arith.constant 0.00787401571 : f32
    %10 = vector.broadcast %cst_3 : f32 to vector<8x1xf32>
    %11 = arith.mulf %9, %10 : vector<8x1xf32>
    %12 = math.sqrt %11 : vector<8x1xf32>
    %cst_4 = arith.constant 9.99999997E-7 : f32
    %13 = vector.broadcast %cst_4 : f32 to vector<8x1xf32>
    %14 = arith.addf %12, %13 : vector<8x1xf32>
    %cst_5 = arith.constant 1.000000e+00 : f32
    %15 = vector.broadcast %cst_5 : f32 to vector<8x1xf32>
    %16 = arith.divf %15, %14 : vector<8x1xf32>
    %c0_6 = arith.constant 0 : index
    %c0_7 = arith.constant 0 : index
    %17 = vector.load %arg2[%c0_6, %c0_7] : memref<1x128xf32, #tpu.memory_space<vmem>>, vector<1x128xf32>
    %18 = vector.broadcast %16 : vector<8x1xf32> to vector<8x128xf32>
    %19 = arith.mulf %6, %18 : vector<8x128xf32>
    %20 = vector.broadcast %17 : vector<1x128xf32> to vector<8x128xf32>
    %21 = arith.mulf %20, %19 : vector<8x128xf32>
    %c0_8 = arith.constant 0 : index
    %c0_9 = arith.constant 0 : index
    %22 = vector.load %arg3[%c0_8, %c0_9] : memref<1x128xf32, #tpu.memory_space<vmem>>, vector<1x128xf32>
    %23 = vector.broadcast %22 : vector<1x128xf32> to vector<8x128xf32>
    %24 = arith.addf %21, %23 : vector<8x128xf32>
    %25 = arith.truncf %24 : vector<8x128xf32> to vector<8x128xbf16>
    %c0_10 = arith.constant 0 : index
    %c0_11 = arith.constant 0 : index
    %26 = vector.load %arg4[%c0_10, %c0_11] : memref<128x128xbf16, #tpu.memory_space<vmem>>, vector<128x128xbf16>
    %cst_12 = arith.constant dense<0.000000e+00> : vector<8x128xf32>
    %27 = tpu.matmul %25, %26, %cst_12 {dimension_numbers = #tpu.dot_dimension_numbers<[1], [0], [0], [1], [0, 0, 1, 1], [], []>} : vector<8x128xbf16>, vector<128x128xbf16>, vector<8x128xf32> -> vector<8x128xf32>
    %c0_13 = arith.constant 0 : index
    %c0_14 = arith.constant 0 : index
    %28 = vector.load %arg5[%c0_13, %c0_14] : memref<1x128xf32, #tpu.memory_space<vmem>>, vector<1x128xf32>
    %29 = vector.broadcast %28 : vector<1x128xf32> to vector<8x128xf32>
    %30 = arith.addf %27, %29 : vector<8x128xf32>
    %31 = arith.addf %0, %30 : vector<8x128xf32>
    %c0_15 = arith.constant 0 : index
    %c0_16 = arith.constant 0 : index
    %32 = vector.load %arg6[%c0_15, %c0_16] : memref<8x128xf32, #tpu.memory_space<vmem>>, vector<8x128xf32>
    tpu.vector_store %arg6[%c0_15, %c0_16], %31 {strides = array<i32>} : memref<8x128xf32, #tpu.memory_space<vmem>>, vector<8x128xf32>,
    return
  }
  func.func @transform_0(%arg0: i32) -> (i32, i32) {
    %c0_i32 = arith.constant 0 : i32
    %c0_i32_0 = arith.constant 0 : i32
    return %arg0, %c0_i32 : i32, i32
  }
  func.func @transform_1(%arg0: i32) -> (i32, i32) {
    %c0_i32 = arith.constant 0 : i32
    %c0_i32_0 = arith.constant 0 : i32
    %c0_i32_1 = arith.constant 0 : i32
    return %c0_i32, %c0_i32_0 : i32, i32
  }
  func.func @transform_2(%arg0: i32) -> (i32, i32) {
    %c0_i32 = arith.constant 0 : i32
    %c0_i32_0 = arith.constant 0 : i32
    %c0_i32_1 = arith.constant 0 : i32
    return %c0_i32, %c0_i32_0 : i32, i32
  }
  func.func @transform_3(%arg0: i32) -> (i32, i32) {
    %c0_i32 = arith.constant 0 : i32
    %c0_i32_0 = arith.constant 0 : i32
    %c0_i32_1 = arith.constant 0 : i32
    return %c0_i32, %c0_i32_0 : i32, i32
  }
  func.func @transform_4(%arg0: i32) -> (i32, i32) {
    %c0_i32 = arith.constant 0 : i32
    %c0_i32_0 = arith.constant 0 : i32
    %c0_i32_1 = arith.constant 0 : i32
    return %c0_i32, %c0_i32_0 : i32, i32
  }
  func.func @transform_5(%arg0: i32) -> (i32, i32) {
    %c0_i32 = arith.constant 0 : i32
    %c0_i32_0 = arith.constant 0 : i32
    return %arg0, %c0_i32 : i32, i32
  }
}

</mosaic_0001>

<llo_original>
// kernel: tpu_custom_call.1
$region0: #{tpu_custom_call.1}
  #allocation0 [shape = 'u32[]', space=smem, size = 0x4, offset = 0x4, fixed_abs, tag = 'smem constant byte address 0x4 - core index']
  #allocation1 [shape = 'u32[72,128]{1,0:T(1,128)}', space=vmem, size = 0x9000, scoped, tag = 'internal scratch']
  %s0 = inlined_call_operand.hbm [shape: f32[16,128], index: 0, kind: input, shape index: {}]
  %s1 = inlined_call_operand.hbm [shape: f32[1,128], index: 1, kind: input, shape index: {}]
  %s2 = inlined_call_operand.vmem [shape: f32[1,128], index: 2, kind: input, shape index: {}]
  %s3 = inlined_call_operand.hbm [shape: bf16[128,128], index: 3, kind: input, shape index: {}]
  %s4 = inlined_call_operand.vmem [shape: f32[1,128], index: 4, kind: input, shape index: {}]
  %s5 = inlined_call_operand.hbm [shape: f32[16,128], index: 5, kind: output, shape index: {}]
  %s6 = sld [smem:[#allocation0]]
  $region65: #{tpu_custom_call.1} parent=0
    _
  %s8 = ssub.s32 1, %s6
  %s9 = scalar_select 0, %s8, %s6
  $region1: #{tpu_custom_call.1} parent=0
    #allocation2 [shape = 'u8[8192]{0}', space=vmem, size = 0x2000, scoped, tag = 'input window, operand 0']
    #allocation3 [shape = 's32[2]{0}', space=sflag, size = 0x8, scoped, tag = 'scoped memory for tpu_custom_call.1']
    #allocation4 [shape = 's32[2]{0}', space=sflag, size = 0x8, scoped, tag = 'scoped memory for tpu_custom_call.1']
    #allocation5 [shape = 'u8[512]{0}', space=vmem, size = 0x400, scoped, tag = 'input window, operand 1, single buffered']
    #allocation6 [shape = 's32[1]{0}', space=sflag, size = 0x4, scoped, tag = 'scoped memory for tpu_custom_call.1']
    #allocation7 [shape = 'u8[32768]{0}', space=vmem, size = 0x8000, scoped, tag = 'input window, operand 3, single buffered']
    #allocation8 [shape = 'u8[8192]{0}', space=vmem, size = 0x2000, scoped, tag = 'output window, operand 0']
    %10 = vsyncpa [#allocation3], 0
    %s11 = scalar_lea.sflag [#allocation3], 1
    %12 = vsyncpa %s11, 0
    %13 = vsyncpa [#allocation6], 0
    %14 = vsyncpa [#allocation4], 0
    %s15 = scalar_lea.sflag [#allocation4], 1
    %16 = vsyncpa %s15, 0
    loop: start=0, step=1, limit=4
    $region2: #{tpu_custom_call.1} parent=1 // loop_pre_header
      _
    $region3: #{tpu_custom_call.1} parent=1 // loop_header
      %s18 = sphi 0, %s22
      %p19 = scmp.ge.s32.totalorder %s18, 4
      %s28 = sphi 0, %s30
      %s31 = sphi 0, %s28
      %s32 = sphi 0, %s31
      %s48 = sphi 0, %s32
      %s52 = sphi 0, %s52
      %s54 = sphi 0, %s52
      %s55 = sphi 0, %s54
      %s69 = sphi 0, %s55
      %s73 = sphi 0, %s73
      %s75 = sphi 0, %s73
      %s76 = sphi 0, %s75
      %s90 = sphi 0, %s76
      %s94 = sphi 0, %s94
      %s96 = sphi 0, %s94
      %s97 = sphi 0, %s96
      %s111 = sphi 0, %s97
      %s115 = sphi 0, %s115
      %s117 = sphi 0, %s115
      %s118 = sphi 0, %s117
      %s132 = sphi 0, %s118
      %s138 = sphi 0, %s140
      %s141 = sphi 0, %s138
      %s142 = sphi 0, %s141
      %s158 = sphi 0, %s142
    $region4: #{tpu_custom_call.1} parent=1 // loop_header_branch
      %21 = sbr.rel (%p19) target = $region8
    $region5: #{tpu_custom_call.1} parent=1 // loop_body
      %s23 = ssub.s32 %s18, 1
      %s24 = ssub.s32 %s18, 2
      %s25 = sadd.s32 %s18, 1
      %s26 = ssub.s32 %s18, %s25
      %p27 = scmp.eq.s32.totalorder %s26, 0
      %s29 = sadd.s32 %s28, 1
      %s30 = scalar_select %p27, %s28, %s29
      %p33 = pneg %p27
      %p34 = scmp.eq.s32.totalorder %s18, 1
      %p35 = por %p33, %p34
      %p36 = scmp.ne.s32.totalorder %s28, %s31
      %p37 = scmp.eq.s32.totalorder %s18, 0
      %p38 = por %p36, %p37
      %p39 = scmp.ne.s32.totalorder %s28, %s31
      %p40 = scmp.eq.s32.totalorder %s23, 1
      %p41 = por %p39, %p40
      %p42 = scmp.ne.s32.totalorder %s31, %s32
      %p43 = scmp.eq.s32.totalorder %s23, 0
      %p44 = por %p42, %p43
      %p45 = scmp.ne.s32.totalorder %s31, %s32
      %p46 = scmp.eq.s32.totalorder %s24, 1
      %p47 = por %p45, %p46
      %p49 = scmp.ne.s32.totalorder %s32, %s48
      %p50 = scmp.eq.s32.totalorder %s24, 0
      %p51 = por %p49, %p50
      %s53 = sadd.s32 %s52, 1
      %p56 = scmp.eq.s32.totalorder %s18, 1
      %p57 = scmp.ne.s32.totalorder %s52, %s54
      %p58 = scmp.eq.s32.totalorder %s18, 0
      %p59 = por %p57, %p58
      %p60 = scmp.ne.s32.totalorder %s52, %s54
      %p61 = scmp.eq.s32.totalorder %s23, 1
      %p62 = por %p60, %p61
      %p63 = scmp.ne.s32.totalorder %s54, %s55
      %p64 = scmp.eq.s32.totalorder %s23, 0
      %p65 = por %p63, %p64
      %p66 = scmp.ne.s32.totalorder %s54, %s55
      %p67 = scmp.eq.s32.totalorder %s24, 1
      %p68 = por %p66, %p67
      %p70 = scmp.ne.s32.totalorder %s55, %s69
      %p71 = scmp.eq.s32.totalorder %s24, 0
      %p72 = por %p70, %p71
      %s74 = sadd.s32 %s73, 1
      %p77 = scmp.eq.s32.totalorder %s18, 1
      %p78 = scmp.ne.s32.totalorder %s73, %s75
      %p79 = scmp.eq.s32.totalorder %s18, 0
      %p80 = por %p78, %p79
      %p81 = scmp.ne.s32.totalorder %s73, %s75
      %p82 = scmp.eq.s32.totalorder %s23, 1
      %p83 = por %p81, %p82
      %p84 = scmp.ne.s32.totalorder %s75, %s76
      %p85 = scmp.eq.s32.totalorder %s23, 0
      %p86 = por %p84, %p85
      %p87 = scmp.ne.s32.totalorder %s75, %s76
      %p88 = scmp.eq.s32.totalorder %s24, 1
      %p89 = por %p87, %p88
      %p91 = scmp.ne.s32.totalorder %s76, %s90
      %p92 = scmp.eq.s32.totalorder %s24, 0
      %p93 = por %p91, %p92
      %s95 = sadd.s32 %s94, 1
      %p98 = scmp.eq.s32.totalorder %s18, 1
      %p99 = scmp.ne.s32.totalorder %s94, %s96
      %p100 = scmp.eq.s32.totalorder %s18, 0
      %p101 = por %p99, %p100
      %p102 = scmp.ne.s32.totalorder %s94, %s96
      %p103 = scmp.eq.s32.totalorder %s23, 1
      %p104 = por %p102, %p103
      %p105 = scmp.ne.s32.totalorder %s96, %s97
      %p106 = scmp.eq.s32.totalorder %s23, 0
      %p107 = por %p105, %p106
      %p108 = scmp.ne.s32.totalorder %s96, %s97
      %p109 = scmp.eq.s32.totalorder %s24, 1
      %p110 = por %p108, %p109
      %p112 = scmp.ne.s32.totalorder %s97, %s111
      %p113 = scmp.eq.s32.totalorder %s24, 0
      %p114 = por %p112, %p113
      %s116 = sadd.s32 %s115, 1
      %p119 = scmp.eq.s32.totalorder %s18, 1
      %p120 = scmp.ne.s32.totalorder %s115, %s117
      %p121 = scmp.eq.s32.totalorder %s18, 0
      %p122 = por %p120, %p121
      %p123 = scmp.ne.s32.totalorder %s115, %s117
      %p124 = scmp.eq.s32.totalorder %s23, 1
      %p125 = por %p123, %p124
      %p126 = scmp.ne.s32.totalorder %s117, %s118
      %p127 = scmp.eq.s32.totalorder %s23, 0
      %p128 = por %p126, %p127
      %p129 = scmp.ne.s32.totalorder %s117, %s118
      %p130 = scmp.eq.s32.totalorder %s24, 1
      %p131 = por %p129, %p130
      %p133 = scmp.ne.s32.totalorder %s118, %s132
      %p134 = scmp.eq.s32.totalorder %s24, 0
      %p135 = por %p133, %p134
      %s136 = ssub.s32 %s18, %s25
      %p137 = scmp.eq.s32.totalorder %s136, 0
      %s139 = sadd.s32 %s138, 1
      %s140 = scalar_select %p137, %s138, %s139
      %p143 = pneg %p137
      %p144 = scmp.eq.s32.totalorder %s18, 1
      %p145 = por %p143, %p144
      %p146 = scmp.ne.s32.totalorder %s138, %s141
      %p147 = scmp.eq.s32.totalorder %s18, 0
      %p148 = por %p146, %p147
      %p149 = scmp.ne.s32.totalorder %s138, %s141
      %p150 = scmp.eq.s32.totalorder %s23, 1
      %p151 = por %p149, %p150
      %p152 = scmp.ne.s32.totalorder %s141, %s142
      %p153 = scmp.eq.s32.totalorder %s23, 0
      %p154 = por %p152, %p153
      %p155 = scmp.ne.s32.totalorder %s141, %s142
      %p156 = scmp.eq.s32.totalorder %s24, 1
      %p157 = por %p155, %p156
      %p159 = scmp.ne.s32.totalorder %s142, %s158
      %p160 = scmp.eq.s32.totalorder %s24, 0
      %p161 = por %p159, %p160
      %p162 = scmp.le.s32.totalorder 1, %s18
      %p163 = scmp.lt.s32.totalorder %s18, 3
      %p164 = pnand %p162, %p163
      %p165 = pneg %p164
      // Predicated region
      $region9: #{tpu_custom_call.1} parent=5 // pred_check
        _
      $region10: #{tpu_custom_call.1} parent=5 // pred_check_branch
        %167 = sbr.rel (%p164) target = $region12
      $region11: #{tpu_custom_call.1} parent=5 // pred_region
        %s168 = ssub.s32 %s18, 1
        // Predicated region
        $region13: #{tpu_custom_call.1} parent=11 // pred_check
          %p169 = pneg %p65
        $region14: #{tpu_custom_call.1} parent=11 // pred_check_branch
          %171 = sbr.rel (%p169) target = $region16
        $region15: #{tpu_custom_call.1} parent=11 // pred_region
          %173 = vsyncadd [#allocation6], 0
          %s175 = sshll.u32 %s1, 4
          %s176 = int_to_ptr.hbm [resolvable:$true] %s175
          %s177 = sshll.u32 [#allocation5], 4
          %s178 = int_to_ptr.vmem [resolvable:$true] %s177
          %180 = dma.hbm_to_vmem [thread:$0]  %s176, 16, %s178, [#allocation6]
        $region16: #{tpu_custom_call.1} parent=11 // pred_fallthru
          _
        // Predicated region
        $region17: #{tpu_custom_call.1} parent=11 // pred_check
          %p181 = pneg %p86
        $region18: #{tpu_custom_call.1} parent=11 // pred_check_branch
          %183 = sbr.rel (%p181) target = $region20
        $region19: #{tpu_custom_call.1} parent=11 // pred_region
          _
        $region20: #{tpu_custom_call.1} parent=11 // pred_fallthru
          _
        // Predicated region
        $region21: #{tpu_custom_call.1} parent=11 // pred_check
          %p184 = pneg %p107
        $region22: #{tpu_custom_call.1} parent=11 // pred_check_branch
          %186 = sbr.rel (%p184) target = $region24
        $region23: #{tpu_custom_call.1} parent=11 // pred_region
          %188 = vsyncadd [#allocation6], 0
          %s189 = sshll.u32 %s3, 4
          %s190 = int_to_ptr.hbm [resolvable:$true] %s189
          %s191 = sshll.u32 [#allocation7], 4
          %s192 = int_to_ptr.vmem [resolvable:$true] %s191
          %197 = dma.hbm_to_vmem [thread:$0]  %s190, 1024, %s192, [#allocation6], 64, 64, 4
        $region24: #{tpu_custom_call.1} parent=11 // pred_fallthru
          _
        // Predicated region
        $region25: #{tpu_custom_call.1} parent=11 // pred_check
          %p198 = pneg %p128
        $region26: #{tpu_custom_call.1} parent=11 // pred_check_branch
          %200 = sbr.rel (%p198) target = $region28
        $region27: #{tpu_custom_call.1} parent=11 // pred_region
          _
        $region28: #{tpu_custom_call.1} parent=11 // pred_fallthru
          _
      $region12: #{tpu_custom_call.1} parent=5 // pred_fallthru
        _
      %p201 = scmp.lt.s32.totalorder %s18, 2
      // Predicated region
      $region29: #{tpu_custom_call.1} parent=5 // pred_check
        %p202 = pneg %p201
      $region30: #{tpu_custom_call.1} parent=5 // pred_check_branch
        %204 = sbr.rel (%p202) target = $region32
      $region31: #{tpu_custom_call.1} parent=5 // pred_region
        // Predicated region
        $region33: #{tpu_custom_call.1} parent=31 // pred_check
          %p205 = pneg %p38
        $region34: #{tpu_custom_call.1} parent=31 // pred_check_branch
          %207 = sbr.rel (%p205) target = $region36
        $region35: #{tpu_custom_call.1} parent=31 // pred_region
          %s208 = sand.u32 %s28, 1
          %s209 = scalar_lea.sflag [#allocation3], %s208
          %s210 = sand.u32 %s28, 1
          %s211 = smul.addr %s210, 8
          %s212 = scalar_lea.vmem [#allocation2], %s211
          %214 = vsyncadd %s209, 0
          %s215 = smul.addr %s18, 8
          %s216 = scalar_lea.hbm %s0, %s215
          %s218 = sshll.u32 %s216, 4
          %s219 = int_to_ptr.hbm [resolvable:$true] %s218
          %s220 = sshll.u32 %s212, 4
          %s221 = int_to_ptr.vmem [resolvable:$true] %s220
          %223 = dma.hbm_to_vmem [thread:$0]  %s219, 128, %s221, %s209
        $region36: #{tpu_custom_call.1} parent=31 // pred_fallthru
          _
      $region32: #{tpu_custom_call.1} parent=5 // pred_fallthru
        _
      %p224 = scmp.le.s32.totalorder 1, %s18
      %p225 = scmp.lt.s32.totalorder %s18, 3
      %p226 = pnand %p224, %p225
      %p227 = pneg %p226
      // Predicated region
      $region37: #{tpu_custom_call.1} parent=5 // pred_check
        _
      $region38: #{tpu_custom_call.1} parent=5 // pred_check_branch
        %229 = sbr.rel (%p226) target = $region40
      $region39: #{tpu_custom_call.1} parent=5 // pred_region
        %s230 = ssub.s32 %s18, 1
        %s231 = sand.u32 %s31, 1
        %s232 = scalar_lea.sflag [#allocation3], %s231
        %s233 = sand.u32 %s31, 1
        %s234 = smul.addr %s233, 8
        %s235 = scalar_lea.vmem [#allocation2], %s234
        // Predicated region
        $region41: #{tpu_custom_call.1} parent=39 // pred_check
          %p236 = pneg %p44
        $region42: #{tpu_custom_call.1} parent=39 // pred_check_branch
          %238 = sbr.rel (%p236) target = $region44
        $region43: #{tpu_custom_call.1} parent=39 // pred_region
          %240 = dma.done %s232, 128
        $region44: #{tpu_custom_call.1} parent=39 // pred_fallthru
          _
        // Predicated region
        $region45: #{tpu_custom_call.1} parent=39 // pred_check
          %p241 = pneg %p65
        $region46: #{tpu_custom_call.1} parent=39 // pred_check_branch
          %243 = sbr.rel (%p241) target = $region48
        $region47: #{tpu_custom_call.1} parent=39 // pred_region
          %245 = dma.done [#allocation6], 16
        $region48: #{tpu_custom_call.1} parent=39 // pred_fallthru
          _
        // Predicated region
        $region49: #{tpu_custom_call.1} parent=39 // pred_check
          %p246 = pneg %p107
        $region50: #{tpu_custom_call.1} parent=39 // pred_check_branch
          %248 = sbr.rel (%p246) target = $region52
        $region51: #{tpu_custom_call.1} parent=39 // pred_region
          %250 = dma.done [#allocation6], 1024
        $region52: #{tpu_custom_call.1} parent=39 // pred_fallthru
          _
        %s251 = sand.u32 %s31, 1
        %s252 = scalar_lea.sflag [#allocation3], %s251
        %s253 = sand.u32 %s31, 1
        %s254 = smul.addr %s253, 8
        %s255 = scalar_lea.vmem [#allocation2], %s254
        %p256 = pneg %p44
        %p257 = pneg %p41
        %p258 = pneg %p65
        %p259 = pneg %p62
        %p260 = pneg %p86
        %p261 = pneg %p83
        %p262 = pneg %p107
        %p263 = pneg %p104
        %p264 = pneg %p128
        %p265 = pneg %p125
        %p266 = pneg %p154
        %p267 = pneg %p151
        %s268 = sand.u32 %s141, 1
        %s269 = scalar_lea.sflag [#allocation4], %s268
        %s270 = sand.u32 %s141, 1
        %s271 = smul.addr %s270, 8
        %s272 = scalar_lea.vmem [#allocation8], %s271
        %v273 = vld [vmem:[%s235] sm:$0xff]
        %274 = vadd.xlane.f32.xlu0 %v273
        %v275 = vpop.xlane.xlu0 %274
        %v276 = vrcp.pop 128.0
        %v277 = vmul.f32 128.0, %v276
        %v278 = vsub.f32 1.0, %v277
        %v279 = vmul.f32 %v276, %v278
        %v280 = vadd.f32 %v276, %v279
        %vm281 = vweird.f32 %v276
        %v282 = vsel %vm281, %v276, %v280
        %v283 = vmul.f32 %v275, %v282
        %v284 = vsub.f32 %v273, %v283
        %v285 = vmul.f32 %v284, %v284
        %286 = vadd.xlane.f32.xlu0 %v285
        %v287 = vpop.xlane.xlu0 %286
        %v288 = vmul.f32 %v287, 0.007874016
        %v289 = vrsqrt.pop %v288
        %v290 = vmul.f32 %v289, %v288
        %v291 = vmul.f32 %v290, %v289
        %v292 = vmul.f32 0.5, %v291
        %v293 = vsub.f32 1.5, %v292
        %v294 = vmul.f32 %v289, %v293
        %v295 = vmul.f32 %v288, %v294
        %vm296 = vcmp.eq.f32.partialorder %v288, inf
        %v297 = vsel %vm296, %v288, %v295
        %vm298 = vcmp.eq.f32.partialorder %v288, 0.0
        %v299 = vand.u32 %v288, 2147483648
        %v300 = vsel %vm298, %v299, %v297
        %v301 = vadd.f32 %v300, 1e-06
        %v302 = vrcp.pop %v301
        %v303 = vmul.f32 %v301, %v302
        %v304 = vsub.f32 1.0, %v303
        %v305 = vmul.f32 %v302, %v304
        %v306 = vadd.f32 %v302, %v305
        %vm307 = vweird.f32 %v301
        %vm308 = vweird.f32 %v302
        %vm309 = vmor %vm307, %vm308
        %v310 = vsel %vm309, %v302, %v306
        %v311 = vand.u32 2147483647, %v301
        %vm312 = vcmp.eq.f32.partialorder %v311, 8.507059e+37
        %v313 = vand.u32 %v301, 2147483648
        %v314 = vor.u32 1.1754944e-38, %v313
        %v315 = vsel %vm312, %v314, %v310
        %v316 = vmul.f32 1.0, %v315
        %v317 = vld [vmem:[#allocation5] sm:$0x1]
        %v318 = vmul.f32 %v284, %v316
        %v320 = vperm.slane %v317, 0
        %v322 = vmul.f32 %v320, %v318
        %v323 = vld [vmem:[%s2] sm:$0x1]
        %v325 = vperm.slane %v323, 0
        %v327 = vadd.f32 %v322, %v325
        %v328 = vpack.c.bf16 %v327, %v327
        %v329 = vld [vmem:[#allocation7] sm:$0xf]
        %v330 = vld [vmem:[#allocation7 + $0x4] sm:$0xf]
        %v331 = vld [vmem:[#allocation7 + $0x8] sm:$0xf]
        %v332 = vld [vmem:[#allocation7 + $0xc] sm:$0xf]
        %v333 = vld [vmem:[#allocation7 + $0x10] sm:$0xf]
        %v334 = vld [vmem:[#allocation7 + $0x14] sm:$0xf]
        %v335 = vld [vmem:[#allocation7 + $0x18] sm:$0xf]
        %v336 = vld [vmem:[#allocation7 + $0x1c] sm:$0xf]
        %v337 = vld [vmem:[#allocation7 + $0x20] sm:$0xf]
        %v338 = vld [vmem:[#allocation7 + $0x24] sm:$0xf]
        %v339 = vld [vmem:[#allocation7 + $0x28] sm:$0xf]
        %v340 = vld [vmem:[#allocation7 + $0x2c] sm:$0xf]
        %v341 = vld [vmem:[#allocation7 + $0x30] sm:$0xf]
        %v342 = vld [vmem:[#allocation7 + $0x34] sm:$0xf]
        %v343 = vld [vmem:[#allocation7 + $0x38] sm:$0xf]
        %v344 = vld [vmem:[#allocation7 + $0x3c] sm:$0xf]
        %v345 = vld [vmem:[%s4] sm:$0x1]
        %v347 = vperm.slane %v345, 0
        %v365 = vunpack.c.l.b16 %v329
        %v366 = vunpack.c.l.b16 %v330
        %v367 = vunpack.c.l.b16 %v331
        %v368 = vunpack.c.l.b16 %v332
        %v369 = vunpack.c.l.b16 %v333
        %v370 = vunpack.c.l.b16 %v334
        %v371 = vunpack.c.l.b16 %v335
        %v372 = vunpack.c.l.b16 %v336
        %v373 = vunpack.c.l.b16 %v337
        %v374 = vunpack.c.l.b16 %v338
        %v375 = vunpack.c.l.b16 %v339
        %v376 = vunpack.c.l.b16 %v340
        %v377 = vunpack.c.l.b16 %v341
        %v378 = vunpack.c.l.b16 %v342
        %v379 = vunpack.c.l.b16 %v343
        %v380 = vunpack.c.l.b16 %v344
        %v381 = vpack.c.b16 %v366, %v365
        %v382 = vpack.c.b16 %v368, %v367
        %v383 = vpack.c.b16 %v370, %v369
        %v384 = vpack.c.b16 %v372, %v371
        %v385 = vpack.c.b16 %v374, %v373
        %v386 = vpack.c.b16 %v376, %v375
        %v387 = vpack.c.b16 %v378, %v377
        %v388 = vpack.c.b16 %v380, %v379
        %397 = vmatpush.bf16.msra.mxu0 %v388
        %398 = vmatpush.bf16.msra.mxu0 %v387
        %399 = vmatpush.bf16.msra.mxu0 %v386
        %400 = vmatpush.bf16.msra.mxu0 %v385
        %401 = vmatpush.bf16.msra.mxu0 %v384
        %402 = vmatpush.bf16.msra.mxu0 %v383
        %403 = vmatpush.bf16.msra.mxu0 %v382
        %404 = vmatpush.bf16.msra.mxu0 %v381
        %405 = vmatmul.bf16.gmra.mxu0 %v328
        %v406 = vpop.f32.mrf.mxu0
        %v407 = vadd.f32 %v347, %v406
        %v408 = vpop.f32.mrf.mxu0
        %409 = vdwg.mxu0
        %v410 = vadd.f32 %v273, %v407
        %411 = vst [vmem:[%s272] sm:$0xff] %v410
        %s412 = sand.u32 %s141, 1
        %s413 = scalar_lea.sflag [#allocation4], %s412
        %s414 = sand.u32 %s141, 1
        %s415 = smul.addr %s414, 8
        %s416 = scalar_lea.vmem [#allocation8], %s415
        // Predicated region
        $region53: #{tpu_custom_call.1} parent=39 // pred_check
          %p417 = pneg %p151
        $region54: #{tpu_custom_call.1} parent=39 // pred_check_branch
          %419 = sbr.rel (%p417) target = $region56
        $region55: #{tpu_custom_call.1} parent=39 // pred_region
          %421 = vsyncadd %s413, 0
          %s422 = smul.addr %s23, 8
          %s423 = scalar_lea.hbm %s5, %s422
          %s425 = sshll.u32 %s416, 4
          %s426 = int_to_ptr.vmem [resolvable:$true] %s425
          %s427 = sshll.u32 %s423, 4
          %s428 = int_to_ptr.hbm [resolvable:$true] %s427
          %430 = dma.vmem_to_hbm [thread:$0]  %s426, 128, %s428, %s413
        $region56: #{tpu_custom_call.1} parent=39 // pred_fallthru
          _
      $region40: #{tpu_custom_call.1} parent=5 // pred_fallthru
        _
      %p431 = scmp.le.s32.totalorder 2, %s18
      // Predicated region
      $region57: #{tpu_custom_call.1} parent=5 // pred_check
        %p432 = pneg %p431
      $region58: #{tpu_custom_call.1} parent=5 // pred_check_branch
        %434 = sbr.rel (%p432) target = $region60
      $region59: #{tpu_custom_call.1} parent=5 // pred_region
        %s435 = ssub.s32 %s18, 2
        // Predicated region
        $region61: #{tpu_custom_call.1} parent=59 // pred_check
          %p436 = pneg %p157
        $region62: #{tpu_custom_call.1} parent=59 // pred_check_branch
          %438 = sbr.rel (%p436) target = $region64
        $region63: #{tpu_custom_call.1} parent=59 // pred_region
          %s439 = sand.u32 %s142, 1
          %s440 = scalar_lea.sflag [#allocation4], %s439
          %s441 = sand.u32 %s142, 1
          %s442 = smul.addr %s441, 8
          %s443 = scalar_lea.vmem [#allocation8], %s442
          %445 = dma.done %s440, 128
        $region64: #{tpu_custom_call.1} parent=59 // pred_fallthru
          _
      $region60: #{tpu_custom_call.1} parent=5 // pred_fallthru
        _
    $region6: #{tpu_custom_call.1} parent=1 // loop_footer
      %s22 = sadd.s32 1, %s18
    $region7: #{tpu_custom_call.1} parent=1 // loop_footer_branch
      %17 = sbr.rel target = $region3
    $region8: #{tpu_custom_call.1} parent=1 // loop_exit
      _
    %446 = vsyncpa [#allocation3], 1
    %s447 = scalar_lea.sflag [#allocation3], 1
    %448 = vsyncpa %s447, 1
    %449 = vsyncpa [#allocation6], 1
    %450 = vsyncpa [#allocation4], 1
    %s451 = scalar_lea.sflag [#allocation4], 1
    %452 = vsyncpa %s451, 1

</llo_original>
